<compile_context>
chip_gen: v7x
topology: tpu7x:2x2x1
jax: 0.10.0
libtpu: 0.0.40
codegen_flags: <defaults>
</compile_context>

<pallas_src>
import jax
import jax.numpy as jnp
from jax.experimental import pallas as pl
from jax.experimental.pallas import tpu as pltpu


def _round_up(x, m):
    return ((x + m - 1) // m) * m


def _pick_batch_tile(batch, seq, d_emb, itemsize, budget_bytes=8 * 1024 * 1024):
    """Largest batch tile whose sent block fits a per-buffer VMEM budget."""
    rows = max(1, budget_bytes // max(1, seq * d_emb * itemsize))
    if rows >= batch:
        return batch
    # TB is the 2nd-to-last dim of the mask / output blocks -> keep it 8-aligned.
    return max(8, (rows // 8) * 8)


def _vmem_limit_bytes(tb, seq, d_emb, hp, cp, itemsize):
    sent_tile = tb * seq * d_emb * itemsize
    mask_tile = tb * seq * itemsize
    out_tile = tb * cp * 4
    weights = (d_emb * hp + hp * cp) * itemsize + (hp + cp) * 4
    need = 2 * (sent_tile + mask_tile + out_tile) + 2 * weights + (4 << 20)
    # >= default scoped limit, and comfortably below v7x's 64 MiB physical VMEM.
    return int(min(max(need, 16 << 20), 48 << 20))


def single_classifier_kernel(sent_ref, mask_ref, w1_ref, b1_ref, w2_ref, b2_ref,
                             out_ref):
    # Blocks: sent (TB, S, D), mask (TB, S), w1 (D, Hp), b1 (1, Hp),
    #         w2 (Hp, Cp), b2 (1, Cp), out (TB, Cp).
    sent = sent_ref[...]                      # compute dtype (f32 or bf16)
    mask = mask_ref[...]                      # same dtype as sent

    tb, s = mask.shape

    # --- pooler: masked mean over seq, as a batched MXU contraction -----------
    # summed[b, d] = sum_s mask[b, s] * sent[b, s, d]
    pooled = jnp.einsum(
        "bms,bsd->bmd", mask.reshape(tb, 1, s), sent,
        preferred_element_type=jnp.float32)    # (TB, 1, D) f32 accumulate
    summed = pooled.reshape(tb, -1)            # (TB, D)

    denom = jnp.sum(mask.astype(jnp.float32), axis=1, keepdims=True)  # (TB, 1)
    denom = jnp.maximum(denom, 1.0)            # guard all-padding rows (no NaN)
    emb = summed * pl.reciprocal(denom, approx=False)                 # (TB, D)

    # --- classifier: Linear -> tanh -> Linear (f32 accumulation) --------------
    w_dtype = w1_ref.dtype
    h = jnp.tanh(
        jnp.dot(emb.astype(w_dtype), w1_ref[...],
                preferred_element_type=jnp.float32) + b1_ref[...])    # (TB, Hp)
    logits = (jnp.dot(h.astype(w_dtype), w2_ref[...],
                      preferred_element_type=jnp.float32) + b2_ref[...])

    out_ref[...] = logits.astype(out_ref.dtype)                       # (TB, Cp)


def single_classifier(sent, mask, w1, b1, w2, b2, *,
                      compute_dtype=jnp.float32):
    """sent: (B, S, D), mask: (B, S). Returns logits (B, C) float32."""
    B, S, D = sent.shape
    H = w1.shape[1]
    C = w2.shape[1]

    # Lane-dense padding of hidden / class dims (weights only; done once).
    Hp = _round_up(H, 128)
    Cp = _round_up(C, 128)
    b1_2d = jnp.asarray(b1, jnp.float32).reshape(1, -1)
    b2_2d = jnp.asarray(b2, jnp.float32).reshape(1, -1)
    w1p = jnp.pad(jnp.asarray(w1, jnp.float32), ((0, 0), (0, Hp - H))).astype(compute_dtype)
    b1p = jnp.pad(b1_2d, ((0, 0), (0, Hp - H)))
    w2p = jnp.pad(jnp.asarray(w2, jnp.float32), ((0, Hp - H), (0, Cp - C))).astype(compute_dtype)
    b2p = jnp.pad(b2_2d, ((0, 0), (0, Cp - C)))

    sent_c = sent.astype(compute_dtype)
    mask_c = mask.astype(compute_dtype)

    itemsize = jnp.dtype(compute_dtype).itemsize
    tb = _pick_batch_tile(B, S, D, itemsize)
    grid = (pl.cdiv(B, tb),)

    grid_spec = pltpu.PrefetchScalarGridSpec(
        num_scalar_prefetch=0,
        grid=grid,
        in_specs=[
            pl.BlockSpec((tb, S, D), lambda i: (i, 0, 0)),   # sent: batch-tiled
            pl.BlockSpec((tb, S), lambda i: (i, 0)),         # mask: batch-tiled
            pl.BlockSpec((D, Hp), lambda i: (0, 0)),          # w1: resident
            pl.BlockSpec((1, Hp), lambda i: (0, 0)),          # b1: resident
            pl.BlockSpec((Hp, Cp), lambda i: (0, 0)),         # w2: resident
            pl.BlockSpec((1, Cp), lambda i: (0, 0)),          # b2: resident
        ],
        out_specs=pl.BlockSpec((tb, Cp), lambda i: (i, 0)),   # lane-dense output
    )

    out_padded = pl.pallas_call(
        single_classifier_kernel,
        out_shape=jax.ShapeDtypeStruct((B, Cp), jnp.float32),
        grid_spec=grid_spec,
        compiler_params=pltpu.CompilerParams(
            dimension_semantics=("parallel",),
            vmem_limit_bytes=_vmem_limit_bytes(tb, S, D, Hp, Cp, itemsize),
        ),
    )(sent_c, mask_c, w1p, b1p, w2p, b2p)

    return out_padded[:, :C]


def reference(sent, mask, w1, b1, w2, b2):
    masked = sent * mask[:, :, None]
    emb = masked.sum(axis=1) / mask.sum(axis=1, keepdims=True)
    h = jnp.tanh(emb @ w1 + b1)
    return h @ w2 + b2


if __name__ == "__main__":
    B, S, D, H, C = 2, 8, 32, 32, 4

    key = jax.random.PRNGKey(0)
    k_sent, k_w1, k_b1, k_w2, k_b2 = jax.random.split(key, 5)

    sent = jax.random.normal(k_sent, (B, S, D), dtype=jnp.float32)
    # Binary padding mask: first 6 / 5 positions valid for the two examples.
    lengths = jnp.array([6, 5], dtype=jnp.int32)
    mask = (jnp.arange(S)[None, :] < lengths[:, None]).astype(jnp.float32)

    # Deterministic parameter init (synthetic, not a checkpoint).
    w1 = jax.random.normal(k_w1, (D, H), dtype=jnp.float32) * 0.1
    b1 = jax.random.normal(k_b1, (H,), dtype=jnp.float32) * 0.1
    w2 = jax.random.normal(k_w2, (H, C), dtype=jnp.float32) * 0.1
    b2 = jax.random.normal(k_b2, (C,), dtype=jnp.float32) * 0.1

    ref = reference(sent, mask, w1, b1, w2, b2)

    # f32 operand path: tight correctness check.
    logits_f32 = single_classifier(sent, mask, w1, b1, w2, b2,
                                   compute_dtype=jnp.float32)
    jax.block_until_ready(logits_f32)
    assert logits_f32.shape == (B, C)
    assert jnp.allclose(logits_f32, ref, atol=1e-4, rtol=1e-4), "f32 mismatch vs reference"

    # bf16 operand path (halves HBM traffic / VMEM footprint; MXU-native on
    # v6e/v7x, f32 accumulation everywhere): looser tolerance.
    logits_bf16 = single_classifier(sent, mask, w1, b1, w2, b2,
                                    compute_dtype=jnp.bfloat16)
    jax.block_until_ready(logits_bf16)
    assert logits_bf16.shape == (B, C)
    assert jnp.allclose(logits_bf16, ref, atol=5e-2, rtol=5e-2), "bf16 mismatch vs reference"

    print("KERNEL_OK")
</pallas_src>

<mosaic_0001>
module attributes {stable_mosaic.version = 11 : i64} {
  func.func @single_classifier_kernel(%arg0: i32, %arg1: memref<2x8x32xf32, #tpu.memory_space<vmem>>, %arg2: memref<2x8xf32, #tpu.memory_space<vmem>>, %arg3: memref<32x128xf32, #tpu.memory_space<vmem>>, %arg4: memref<1x128xf32, #tpu.memory_space<vmem>>, %arg5: memref<128x128xf32, #tpu.memory_space<vmem>>, %arg6: memref<1x128xf32, #tpu.memory_space<vmem>>, %arg7: memref<2x128xf32, #tpu.memory_space<vmem>>) attributes {dimension_semantics = [#tpu.dimension_semantics<parallel>], iteration_bounds = array<i64: 1>, scalar_prefetch = 0 : i64, scratch_operands = 0 : i64, tpu.core_type = #tpu.core_type<tc>, window_params = [{transform_indices = @transform_0, window_bounds = array<i64: 2, 8, 32>}, {transform_indices = @transform_1, window_bounds = array<i64: 2, 8>}, {pipeline_mode = #tpu.pipeline_mode<synchronous>, transform_indices = @transform_2, window_bounds = array<i64: 32, 128>}, {pipeline_mode = #tpu.pipeline_mode<synchronous>, transform_indices = @transform_3, window_bounds = array<i64: 1, 128>}, {pipeline_mode = #tpu.pipeline_mode<synchronous>, transform_indices = @transform_4, window_bounds = array<i64: 128, 128>}, {pipeline_mode = #tpu.pipeline_mode<synchronous>, transform_indices = @transform_5, window_bounds = array<i64: 1, 128>}, {transform_indices = @transform_6, window_bounds = array<i64: 2, 128>}]} {
    %c0 = arith.constant 0 : index
    %c0_0 = arith.constant 0 : index
    %c0_1 = arith.constant 0 : index
    %0 = vector.load %arg1[%c0, %c0_0, %c0_1] : memref<2x8x32xf32, #tpu.memory_space<vmem>>, vector<2x8x32xf32>
    %c0_2 = arith.constant 0 : index
    %c0_3 = arith.constant 0 : index
    %1 = vector.load %arg2[%c0_2, %c0_3] : memref<2x8xf32, #tpu.memory_space<vmem>>, vector<2x8xf32>
    %2 = vector.shape_cast %1 : vector<2x8xf32> to vector<2x1x8xf32>
    "tpu.trace_start"() <{level = 10 : i32, message = "bms,bsd->bmd"}> : () -> ()
    %cst = arith.constant dense<0.000000e+00> : vector<2x1x32xf32>
    %3 = tpu.matmul %2, %0, %cst {dimension_numbers = #tpu.dot_dimension_numbers<[2], [1], [1], [2], [0, 0, 0, 1, 1, 2], [0], [0]>} : vector<2x1x8xf32>, vector<2x8x32xf32>, vector<2x1x32xf32> -> vector<2x1x32xf32>
    "tpu.trace_stop"() : () -> ()
    %4 = vector.shape_cast %3 : vector<2x1x32xf32> to vector<2x32xf32>
    %cst_4 = arith.constant dense<0.000000e+00> : vector<2xf32>
    %5 = vector.multi_reduction <add>, %1, %cst_4 [1] : vector<2x8xf32> to vector<2xf32>
    %6 = vector.shape_cast %5 : vector<2xf32> to vector<2x1xf32>
    %cst_5 = arith.constant 1.000000e+00 : f32
    %7 = vector.broadcast %cst_5 : f32 to vector<2x1xf32>
    %8 = arith.maximumf %6, %7 : vector<2x1xf32>
    %9 = tpu.reciprocal %8 : vector<2x1xf32> -> vector<2x1xf32>
    %10 = vector.broadcast %9 : vector<2x1xf32> to vector<2x32xf32>
    %11 = arith.mulf %4, %10 : vector<2x32xf32>
    %c0_6 = arith.constant 0 : index
    %c0_7 = arith.constant 0 : index
    %12 = vector.load %arg3[%c0_6, %c0_7] : memref<32x128xf32, #tpu.memory_space<vmem>>, vector<32x128xf32>
    %cst_8 = arith.constant dense<0.000000e+00> : vector<2x128xf32>
    %13 = tpu.matmul %11, %12, %cst_8 {dimension_numbers = #tpu.dot_dimension_numbers<[1], [0], [0], [1], [0, 0, 1, 1], [], []>} : vector<2x32xf32>, vector<32x128xf32>, vector<2x128xf32> -> vector<2x128xf32>
    %c0_9 = arith.constant 0 : index
    %c0_10 = arith.constant 0 : index
    %14 = vector.load %arg4[%c0_9, %c0_10] : memref<1x128xf32, #tpu.memory_space<vmem>>, vector<1x128xf32>
    %15 = vector.broadcast %14 : vector<1x128xf32> to vector<2x128xf32>
    %16 = arith.addf %13, %15 : vector<2x128xf32>
    %17 = math.tanh %16 : vector<2x128xf32>
    %c0_11 = arith.constant 0 : index
    %c0_12 = arith.constant 0 : index
    %18 = vector.load %arg5[%c0_11, %c0_12] : memref<128x128xf32, #tpu.memory_space<vmem>>, vector<128x128xf32>
    %cst_13 = arith.constant dense<0.000000e+00> : vector<2x128xf32>
    %19 = tpu.matmul %17, %18, %cst_13 {dimension_numbers = #tpu.dot_dimension_numbers<[1], [0], [0], [1], [0, 0, 1, 1], [], []>} : vector<2x128xf32>, vector<128x128xf32>, vector<2x128xf32> -> vector<2x128xf32>
    %c0_14 = arith.constant 0 : index
    %c0_15 = arith.constant 0 : index
    %20 = vector.load %arg6[%c0_14, %c0_15] : memref<1x128xf32, #tpu.memory_space<vmem>>, vector<1x128xf32>
    %21 = vector.broadcast %20 : vector<1x128xf32> to vector<2x128xf32>
    %22 = arith.addf %19, %21 : vector<2x128xf32>
    %c0_16 = arith.constant 0 : index
    %c0_17 = arith.constant 0 : index
    %23 = vector.load %arg7[%c0_16, %c0_17] : memref<2x128xf32, #tpu.memory_space<vmem>>, vector<2x128xf32>
    tpu.vector_store %arg7[%c0_16, %c0_17], %22 {strides = array<i32>} : memref<2x128xf32, #tpu.memory_space<vmem>>, vector<2x128xf32>,
    return
  }
  func.func @transform_0(%arg0: i32) -> (i32, i32, i32) {
    %c0_i32 = arith.constant 0 : i32
    %c0_i32_0 = arith.constant 0 : i32
    %c0_i32_1 = arith.constant 0 : i32
    return %arg0, %c0_i32, %c0_i32_0 : i32, i32, i32
  }
  func.func @transform_1(%arg0: i32) -> (i32, i32) {
    %c0_i32 = arith.constant 0 : i32
    %c0_i32_0 = arith.constant 0 : i32
    return %arg0, %c0_i32 : i32, i32
  }
  func.func @transform_2(%arg0: i32) -> (i32, i32) {
    %c0_i32 = arith.constant 0 : i32
    %c0_i32_0 = arith.constant 0 : i32
    %c0_i32_1 = arith.constant 0 : i32
    return %c0_i32, %c0_i32_0 : i32, i32
  }
  func.func @transform_3(%arg0: i32) -> (i32, i32) {
    %c0_i32 = arith.constant 0 : i32
    %c0_i32_0 = arith.constant 0 : i32
    %c0_i32_1 = arith.constant 0 : i32
    return %c0_i32, %c0_i32_0 : i32, i32
  }
  func.func @transform_4(%arg0: i32) -> (i32, i32) {
    %c0_i32 = arith.constant 0 : i32
    %c0_i32_0 = arith.constant 0 : i32
    %c0_i32_1 = arith.constant 0 : i32
    return %c0_i32, %c0_i32_0 : i32, i32
  }
  func.func @transform_5(%arg0: i32) -> (i32, i32) {
    %c0_i32 = arith.constant 0 : i32
    %c0_i32_0 = arith.constant 0 : i32
    %c0_i32_1 = arith.constant 0 : i32
    return %c0_i32, %c0_i32_0 : i32, i32
  }
  func.func @transform_6(%arg0: i32) -> (i32, i32) {
    %c0_i32 = arith.constant 0 : i32
    %c0_i32_0 = arith.constant 0 : i32
    return %arg0, %c0_i32 : i32, i32
  }
}

</mosaic_0001>

<llo_original>
// kernel: tpu_custom_call.1
$region0: #{tpu_custom_call.1}
  #allocation0 [shape = 'u32[]', space=smem, size = 0x4, offset = 0x4, fixed_abs, tag = 'smem constant byte address 0x4 - core index']
  #allocation1 [shape = 'u32[144,128]{1,0:T(1,128)}', space=vmem, size = 0x12000, scoped, tag = 'internal scratch']
  %s0 = inlined_call_operand.hbm [shape: f32[2,8,32], index: 0, kind: input, shape index: {}]
  %s1 = inlined_call_operand.vmem [shape: f32[2,8], index: 1, kind: input, shape index: {}]
  %s2 = inlined_call_operand.hbm [shape: f32[32,128], index: 2, kind: input, shape index: {}]
  %s3 = inlined_call_operand.vmem [shape: f32[1,128], index: 3, kind: input, shape index: {}]
  %s4 = inlined_call_operand.hbm [shape: f32[128,128], index: 4, kind: input, shape index: {}]
  %s5 = inlined_call_operand.vmem [shape: f32[1,128], index: 5, kind: input, shape index: {}]
  %s6 = inlined_call_operand.hbm [shape: f32[2,128], index: 6, kind: output, shape index: {}]
  %s7 = sld [smem:[#allocation0]]
  $region46: #{tpu_custom_call.1} parent=0
    _
  %s9 = ssub.s32 1, %s7
  %s10 = scalar_select 0, %s9, %s7
  $region1: #{tpu_custom_call.1} parent=0
    #allocation2 [shape = 'u8[8192]{0}', space=vmem, size = 0x2000, scoped, tag = 'input window, operand 0, single buffered']
    #allocation3 [shape = 's32[1]{0}', space=sflag, size = 0x4, scoped, tag = 'scoped memory for tpu_custom_call.1']
    #allocation4 [shape = 's32[1]{0}', space=sflag, size = 0x4, scoped, tag = 'scoped memory for tpu_custom_call.1']
    #allocation5 [shape = 'u8[16384]{0}', space=vmem, size = 0x4000, scoped, tag = 'input window, operand 2, single buffered']
    #allocation6 [shape = 's32[1]{0}', space=sflag, size = 0x4, scoped, tag = 'scoped memory for tpu_custom_call.1']
    #allocation7 [shape = 'u8[65536]{0}', space=vmem, size = 0x10000, scoped, tag = 'input window, operand 4, single buffered']
    #allocation8 [shape = 'u8[1024]{0}', space=vmem, size = 0x400, scoped, tag = 'output window, operand 0, single buffered']
    %11 = vsyncpa [#allocation3], 0
    %12 = vsyncpa [#allocation6], 0
    %13 = vsyncpa [#allocation4], 0
    // Predicated region
    $region2: #{tpu_custom_call.1} parent=1 // pred_check
      _
    $region3: #{tpu_custom_call.1} parent=1 // pred_check_branch
      %15 = sbr.rel (0) target = $region5
    $region4: #{tpu_custom_call.1} parent=1 // pred_region
      %s17 = ssub.s32 256, 256
      %18 = vsyncadd [#allocation3], %s17
      %s19 = sshll.u32 [#allocation2], 4
      %s20 = int_to_ptr.vmem [resolvable:$true] %s19
      %25 = dma.hbm_to_vmem [thread:$0]  %s0, 256, %s20, [#allocation3], 128, 128, 8
    $region5: #{tpu_custom_call.1} parent=1 // pred_fallthru
      _
    // Predicated region
    $region6: #{tpu_custom_call.1} parent=1 // pred_check
      _
    $region7: #{tpu_custom_call.1} parent=1 // pred_check_branch
      %27 = sbr.rel (0) target = $region9
    $region8: #{tpu_custom_call.1} parent=1 // pred_region
      _
    $region9: #{tpu_custom_call.1} parent=1 // pred_fallthru
      _
    // Predicated region
    $region10: #{tpu_custom_call.1} parent=1 // pred_check
      _
    $region11: #{tpu_custom_call.1} parent=1 // pred_check_branch
      %29 = sbr.rel (0) target = $region13
    $region12: #{tpu_custom_call.1} parent=1 // pred_region
      %s31 = ssub.s32 512, 512
      %32 = vsyncadd [#allocation6], %s31
      %s33 = sshll.u32 [#allocation5], 4
      %s34 = int_to_ptr.vmem [resolvable:$true] %s33
      %39 = dma.hbm_to_vmem [thread:$0]  %s2, 512, %s34, [#allocation6], 128, 128, 8
    $region13: #{tpu_custom_call.1} parent=1 // pred_fallthru
      _
    // Predicated region
    $region14: #{tpu_custom_call.1} parent=1 // pred_check
      _
    $region15: #{tpu_custom_call.1} parent=1 // pred_check_branch
      %41 = sbr.rel (0) target = $region17
    $region16: #{tpu_custom_call.1} parent=1 // pred_region
      _
    $region17: #{tpu_custom_call.1} parent=1 // pred_fallthru
      _
    // Predicated region
    $region18: #{tpu_custom_call.1} parent=1 // pred_check
      _
    $region19: #{tpu_custom_call.1} parent=1 // pred_check_branch
      %43 = sbr.rel (0) target = $region21
    $region20: #{tpu_custom_call.1} parent=1 // pred_region
      %s45 = ssub.s32 2048, 2048
      %46 = vsyncadd [#allocation6], %s45
      %s47 = sshll.u32 [#allocation7], 4
      %s48 = int_to_ptr.vmem [resolvable:$true] %s47
      %53 = dma.hbm_to_vmem [thread:$0]  %s4, 2048, %s48, [#allocation6], 128, 128, 8
    $region21: #{tpu_custom_call.1} parent=1 // pred_fallthru
      _
    // Predicated region
    $region22: #{tpu_custom_call.1} parent=1 // pred_check
      _
    $region23: #{tpu_custom_call.1} parent=1 // pred_check_branch
      %55 = sbr.rel (0) target = $region25
    $region24: #{tpu_custom_call.1} parent=1 // pred_region
      _
    $region25: #{tpu_custom_call.1} parent=1 // pred_fallthru
      _
    // Predicated region
    $region26: #{tpu_custom_call.1} parent=1 // pred_check
      _
    $region27: #{tpu_custom_call.1} parent=1 // pred_check_branch
      %57 = sbr.rel (0) target = $region29
    $region28: #{tpu_custom_call.1} parent=1 // pred_region
      %58 = dma.done [#allocation3], 256
    $region29: #{tpu_custom_call.1} parent=1 // pred_fallthru
      _
    // Predicated region
    $region30: #{tpu_custom_call.1} parent=1 // pred_check
      _
    $region31: #{tpu_custom_call.1} parent=1 // pred_check_branch
      %60 = sbr.rel (0) target = $region33
    $region32: #{tpu_custom_call.1} parent=1 // pred_region
      %61 = dma.done [#allocation6], 512
    $region33: #{tpu_custom_call.1} parent=1 // pred_fallthru
      _
    // Predicated region
    $region34: #{tpu_custom_call.1} parent=1 // pred_check
      _
    $region35: #{tpu_custom_call.1} parent=1 // pred_check_branch
      %63 = sbr.rel (0) target = $region37
    $region36: #{tpu_custom_call.1} parent=1 // pred_region
      %64 = dma.done [#allocation6], 2048
    $region37: #{tpu_custom_call.1} parent=1 // pred_fallthru
      _
    %v65 = vld [vmem:[#allocation2] sm:$0xff]
    %v66 = vld [vmem:[#allocation2 + $0x8] sm:$0xff]
    %v67 = vld [vmem:[%s1] sm:$0x3]
    %v70 = vunpack.c.l.s4 1966171168
    %v71 = vunpack.c.0.s8 %v70
    %v72 = vlaneseq
    %v73 = vshrl.u32 %v72, 7
    %v74 = vsub.s32 %v71, %v73
    %v75 = vrot.slane %v67, %v74
    %v76 = vcombine.high %v75, %v75
    %v78 = vunpack.c.l.s4 1966171168
    %v79 = vunpack.c.0.s8 %v78
    %v80 = vlaneseq
    %v81 = vshrl.u32 %v80, 7
    %v82 = vsub.s32 %v79, %v81
    %v83 = vrot.slane %v75, %v82
    %v85 = vunpack.c.l.s4 1966171168
    %v86 = vunpack.c.0.s8 %v85
    %v87 = vlaneseq
    %v88 = vshrl.u32 %v87, 7
    %v89 = vsub.s32 %v86, %v88
    %v90 = vrot.slane %v76, %v89
    %vm91 = vcmask 64512
    %v92 = vsel %vm91, %v83, 0
    %94 = vmatprep.subr.mxu0 0.0
    %95 = vmatpush1.msra.mxu0 %v65
    %96 = vmatprep.subr.mxu0 0.0
    %97 = vmatpush1.msra.mxu0 0.0
    %98 = vmatprep.subr.mxu0 0.0
    %99 = vmatpush1.msra.mxu0 0.0
    %100 = vmatprep.subr.mxu0 0.0
    %101 = vmatpush1.msra.mxu0 0.0
    %102 = vmatprep.subr.mxu0 0.0
    %103 = vmatpush1.msra.mxu0 0.0
    %104 = vmatprep.subr.mxu0 0.0
    %105 = vmatpush1.msra.mxu0 0.0
    %106 = vmatprep.subr.mxu0 0.0
    %107 = vmatpush1.msra.mxu0 0.0
    %108 = vmatprep.subr.mxu0 0.0
    %109 = vmatpush1.msra.mxu0 0.0
    %110 = vmatprep.subr.mxu0 0.0
    %111 = vmatpush1.msra.mxu0 0.0
    %112 = vmatprep.subr.mxu0 0.0
    %113 = vmatpush1.msra.mxu0 0.0
    %114 = vmatprep.subr.mxu0 0.0
    %115 = vmatpush1.msra.mxu0 0.0
    %116 = vmatprep.subr.mxu0 0.0
    %117 = vmatpush1.msra.mxu0 0.0
    %118 = vmatprep.subr.mxu0 0.0
    %119 = vmatpush1.msra.mxu0 0.0
    %120 = vmatprep.subr.mxu0 0.0
    %121 = vmatpush1.msra.mxu0 0.0
    %122 = vmatprep.subr.mxu0 0.0
    %123 = vmatpush1.msra.mxu0 0.0
    %124 = vmatprep.subr.mxu0 0.0
    %125 = vmatpush1.msra.mxu0 0.0
    %126 = vmatprep.subr.mxu0 0.0
    %127 = vmatpush1.msra.mxu0 0.0
    %128 = vmatprep.subr.mxu0 0.0
    %129 = vmatpush1.msra.mxu0 0.0
    %130 = vmatprep.subr.mxu0 0.0
    %131 = vmatpush1.msra.mxu0 0.0
    %132 = vmatprep.subr.mxu0 0.0
    %133 = vmatpush1.msra.mxu0 0.0
    %134 = vmatprep.subr.mxu0 0.0
    %135 = vmatpush1.msra.mxu0 0.0
    %136 = vmatprep.subr.mxu0 0.0
    %137 = vmatpush1.msra.mxu0 0.0
    %138 = vmatprep.subr.mxu0 0.0
    %139 = vmatpush1.msra.mxu0 0.0
    %140 = vmatprep.subr.mxu0 0.0
    %141 = vmatpush1.msra.mxu0 0.0
    %142 = vmatprep.subr.mxu0 0.0
    %143 = vmatpush1.msra.mxu0 0.0
    %144 = vmatprep.subr.mxu0 0.0
    %145 = vmatpush1.msra.mxu0 0.0
    %146 = vmatprep.subr.mxu0 0.0
    %147 = vmatpush1.msra.mxu0 0.0
    %148 = vmatprep.subr.mxu0 0.0
    %149 = vmatpush1.msra.mxu0 0.0
    %150 = vmatprep.subr.mxu0 0.0
    %151 = vmatpush1.msra.mxu0 0.0
    %152 = vmatprep.subr.mxu0 0.0
    %153 = vmatpush1.msra.mxu0 0.0
    %154 = vmatprep.subr.mxu0 0.0
    %155 = vmatpush1.msra.mxu0 0.0
    %156 = vmatprep.subr.mxu0 0.0
    %157 = vmatpush1.msra.mxu0 0.0
    %158 = vmatprep.mubr.f32.mxu0 0.0
    %159 = vmatmul.mubr.f32.gmra.mrb[0].mxu0 %v92
    %v160 = vpop.f32.mrb[0].mxu0
    %v161 = vadd.f32 0.0, %v160
    %v162 = vpop.f32.mrb[0].mxu0
    %163 = vdwg.mxu0
    %v164 = vsel %vm91, %v90, 0
    %166 = vmatprep.subr.mxu0 0.0
    %167 = vmatpush1.msra.mxu0 %v66
    %168 = vmatprep.subr.mxu0 0.0
    %169 = vmatpush1.msra.mxu0 0.0
    %170 = vmatprep.subr.mxu0 0.0
    %171 = vmatpush1.msra.mxu0 0.0
    %172 = vmatprep.subr.mxu0 0.0
    %173 = vmatpush1.msra.mxu0 0.0
    %174 = vmatprep.subr.mxu0 0.0
    %175 = vmatpush1.msra.mxu0 0.0
    %176 = vmatprep.subr.mxu0 0.0
    %177 = vmatpush1.msra.mxu0 0.0
    %178 = vmatprep.subr.mxu0 0.0
    %179 = vmatpush1.msra.mxu0 0.0
    %180 = vmatprep.subr.mxu0 0.0
    %181 = vmatpush1.msra.mxu0 0.0
    %182 = vmatprep.subr.mxu0 0.0
    %183 = vmatpush1.msra.mxu0 0.0
    %184 = vmatprep.subr.mxu0 0.0
    %185 = vmatpush1.msra.mxu0 0.0
    %186 = vmatprep.subr.mxu0 0.0
    %187 = vmatpush1.msra.mxu0 0.0
    %188 = vmatprep.subr.mxu0 0.0
    %189 = vmatpush1.msra.mxu0 0.0
    %190 = vmatprep.subr.mxu0 0.0
    %191 = vmatpush1.msra.mxu0 0.0
    %192 = vmatprep.subr.mxu0 0.0
    %193 = vmatpush1.msra.mxu0 0.0
    %194 = vmatprep.subr.mxu0 0.0
    %195 = vmatpush1.msra.mxu0 0.0
    %196 = vmatprep.subr.mxu0 0.0
    %197 = vmatpush1.msra.mxu0 0.0
    %198 = vmatprep.subr.mxu0 0.0
    %199 = vmatpush1.msra.mxu0 0.0
    %200 = vmatprep.subr.mxu0 0.0
    %201 = vmatpush1.msra.mxu0 0.0
    %202 = vmatprep.subr.mxu0 0.0
    %203 = vmatpush1.msra.mxu0 0.0
    %204 = vmatprep.subr.mxu0 0.0
    %205 = vmatpush1.msra.mxu0 0.0
    %206 = vmatprep.subr.mxu0 0.0
    %207 = vmatpush1.msra.mxu0 0.0
    %208 = vmatprep.subr.mxu0 0.0
    %209 = vmatpush1.msra.mxu0 0.0
    %210 = vmatprep.subr.mxu0 0.0
    %211 = vmatpush1.msra.mxu0 0.0
    %212 = vmatprep.subr.mxu0 0.0
    %213 = vmatpush1.msra.mxu0 0.0
    %214 = vmatprep.subr.mxu0 0.0
    %215 = vmatpush1.msra.mxu0 0.0
    %216 = vmatprep.subr.mxu0 0.0
    %217 = vmatpush1.msra.mxu0 0.0
    %218 = vmatprep.subr.mxu0 0.0
    %219 = vmatpush1.msra.mxu0 0.0
    %220 = vmatprep.subr.mxu0 0.0
    %221 = vmatpush1.msra.mxu0 0.0
    %222 = vmatprep.subr.mxu0 0.0
    %223 = vmatpush1.msra.mxu0 0.0
    %224 = vmatprep.subr.mxu0 0.0
    %225 = vmatpush1.msra.mxu0 0.0
    %226 = vmatprep.subr.mxu0 0.0
    %227 = vmatpush1.msra.mxu0 0.0
    %228 = vmatprep.subr.mxu0 0.0
    %229 = vmatpush1.msra.mxu0 0.0
    %230 = vmatprep.mubr.f32.mxu0 0.0
    %231 = vmatmul.mubr.f32.gmra.mrb[0].mxu0 %v164
    %v232 = vpop.f32.mrb[0].mxu0
    %v233 = vadd.f32 0.0, %v232
    %v234 = vpop.f32.mrb[0].mxu0
    %235 = vdwg.mxu0
    %vm236 = vcmask 58368
    %v237 = vsel %vm236, %v67, 0.0
    %238 = vadd.xlane.f32.xlu0 %v237
    %v239 = vpop.xlane.xlu0 %238
    %v240 = vmax.f32 %v239, 1.0
    %v241 = vrcp.pop %v240
    %v243 = vrot.slane %v241, 1
    %v246 = vmul.f32 %v161, %v241
    %v247 = vmul.f32 %v233, %v243
    %v248 = vld [vmem:[#allocation5] sm:$0xff]
    %v249 = vld [vmem:[#allocation5 + $0x8] sm:$0xff]
    %v250 = vld [vmem:[#allocation5 + $0x10] sm:$0xff]
    %v251 = vld [vmem:[#allocation5 + $0x18] sm:$0xff]
    %v252 = vld [vmem:[%s3] sm:$0x1]
    %v254 = vlaneseq
    %v255 = vshrl.u32 %v254, 7
    %v256 = vsub.s32 0, %v255
    %v257 = vrot.slane %v252, %v256
    %v261 = vrot.slane %v247, 7
    %vm262 = vcmask 1041409
    %v263 = vsel %vm262, %v261, %v246
    %vm264 = vcmask 261120
    %v265 = vsel %vm264, %v263, 0
    %267 = vmatprep.subr.mxu0 0.0
    %268 = vmatpush1.msra.mxu0 %v248
    %269 = vmatprep.subr.mxu0 0.0
    %270 = vmatpush1.msra.mxu0 %v249
    %271 = vmatprep.subr.mxu0 0.0
    %272 = vmatpush1.msra.mxu0 %v250
    %273 = vmatprep.subr.mxu0 0.0
    %274 = vmatpush1.msra.mxu0 %v251
    %275 = vmatprep.subr.mxu0 0.0
    %276 = vmatpush1.msra.mxu0 0.0
    %277 = vmatprep.subr.mxu0 0.0
    %278 = vmatpush1.msra.mxu0 0.0
    %279 = vmatprep.subr.mxu0 0.0
    %280 = vmatpush1.msra.mxu0 0.0
    %281 = vmatprep.subr.mxu0 0.0
    %282 = vmatpush1.msra.mxu0 0.0
    %283 = vmatprep.subr.mxu0 0.0
    %284 = vmatpush1.msra.mxu0 0.0
    %285 = vmatprep.subr.mxu0 0.0
    %286 = vmatpush1.msra.mxu0 0.0
    %287 = vmatprep.subr.mxu0 0.0
    %288 = vmatpush1.msra.mxu0 0.0
    %289 = vmatprep.subr.mxu0 0.0
    %290 = vmatpush1.msra.mxu0 0.0
    %291 = vmatprep.subr.mxu0 0.0
    %292 = vmatpush1.msra.mxu0 0.0
    %293 = vmatprep.subr.mxu0 0.0
    %294 = vmatpush1.msra.mxu0 0.0
    %295 = vmatprep.subr.mxu0 0.0
    %296 = vmatpush1.msra.mxu0 0.0
    %297 = vmatprep.subr.mxu0 0.0
    %298 = vmatpush1.msra.mxu0 0.0
    %299 = vmatprep.subr.mxu0 0.0
    %300 = vmatpush1.msra.mxu0 0.0
    %301 = vmatprep.subr.mxu0 0.0
    %302 = vmatpush1.msra.mxu0 0.0
    %303 = vmatprep.subr.mxu0 0.0
    %304 = vmatpush1.msra.mxu0 0.0
    %305 = vmatprep.subr.mxu0 0.0
    %306 = vmatpush1.msra.mxu0 0.0
    %307 = vmatprep.subr.mxu0 0.0
    %308 = vmatpush1.msra.mxu0 0.0
    %309 = vmatprep.subr.mxu0 0.0
    %310 = vmatpush1.msra.mxu0 0.0
    %311 = vmatprep.subr.mxu0 0.0
    %312 = vmatpush1.msra.mxu0 0.0
    %313 = vmatprep.subr.mxu0 0.0
    %314 = vmatpush1.msra.mxu0 0.0
    %315 = vmatprep.subr.mxu0 0.0
    %316 = vmatpush1.msra.mxu0 0.0
    %317 = vmatprep.subr.mxu0 0.0
    %318 = vmatpush1.msra.mxu0 0.0
    %319 = vmatprep.subr.mxu0 0.0
    %320 = vmatpush1.msra.mxu0 0.0
    %321 = vmatprep.subr.mxu0 0.0
    %322 = vmatpush1.msra.mxu0 0.0
    %323 = vmatprep.subr.mxu0 0.0
    %324 = vmatpush1.msra.mxu0 0.0
    %325 = vmatprep.subr.mxu0 0.0
    %326 = vmatpush1.msra.mxu0 0.0
    %327 = vmatprep.subr.mxu0 0.0
    %328 = vmatpush1.msra.mxu0 0.0
    %329 = vmatprep.subr.mxu0 0.0
    %330 = vmatpush1.msra.mxu0 0.0
    %331 = vmatprep.mubr.f32.mxu0 0.0
    %332 = vmatmul.mubr.f32.gmra.mrb[0].mxu0 %v265
    %v333 = vpop.f32.mrb[0].mxu0
    %v334 = vadd.f32 %v257, %v333
    %v335 = vpop.f32.mrb[0].mxu0
    %336 = vdwg.mxu0
    %v337 = vtanh.pop %v334
    %v338 = vld [vmem:[#allocation7] sm:$0xff]
    %v339 = vld [vmem:[#allocation7 + $0x8] sm:$0xff]
    %v340 = vld [vmem:[#allocation7 + $0x10] sm:$0xff]
    %v341 = vld [vmem:[#allocation7 + $0x18] sm:$0xff]
    %v342 = vld [vmem:[#allocation7 + $0x20] sm:$0xff]
    %v343 = vld [vmem:[#allocation7 + $0x28] sm:$0xff]
    %v344 = vld [vmem:[#allocation7 + $0x30] sm:$0xff]
    %v345 = vld [vmem:[#allocation7 + $0x38] sm:$0xff]
    %v346 = vld [vmem:[#allocation7 + $0x40] sm:$0xff]
    %v347 = vld [vmem:[#allocation7 + $0x48] sm:$0xff]
    %v348 = vld [vmem:[#allocation7 + $0x50] sm:$0xff]
    %v349 = vld [vmem:[#allocation7 + $0x58] sm:$0xff]
    %v350 = vld [vmem:[#allocation7 + $0x60] sm:$0xff]
    %v351 = vld [vmem:[#allocation7 + $0x68] sm:$0xff]
    %v352 = vld [vmem:[#allocation7 + $0x70] sm:$0xff]
    %v353 = vld [vmem:[#allocation7 + $0x78] sm:$0xff]
    %v354 = vld [vmem:[%s5] sm:$0x1]
    %v356 = vlaneseq
    %v357 = vshrl.u32 %v356, 7
    %v358 = vsub.s32 0, %v357
    %v359 = vrot.slane %v354, %v358
    %361 = vmatprep.subr.mxu0 0.0
    %362 = vmatpush1.msra.mxu0 %v338
    %363 = vmatprep.subr.mxu0 0.0
    %364 = vmatpush1.msra.mxu0 %v339
    %365 = vmatprep.subr.mxu0 0.0
    %366 = vmatpush1.msra.mxu0 %v340
    %367 = vmatprep.subr.mxu0 0.0
    %368 = vmatpush1.msra.mxu0 %v341
    %369 = vmatprep.subr.mxu0 0.0
    %370 = vmatpush1.msra.mxu0 %v342
    %371 = vmatprep.subr.mxu0 0.0
    %372 = vmatpush1.msra.mxu0 %v343
    %373 = vmatprep.subr.mxu0 0.0
    %374 = vmatpush1.msra.mxu0 %v344
    %375 = vmatprep.subr.mxu0 0.0
    %376 = vmatpush1.msra.mxu0 %v345
    %377 = vmatprep.subr.mxu0 0.0
    %378 = vmatpush1.msra.mxu0 %v346
    %379 = vmatprep.subr.mxu0 0.0
    %380 = vmatpush1.msra.mxu0 %v347
    %381 = vmatprep.subr.mxu0 0.0
    %382 = vmatpush1.msra.mxu0 %v348
    %383 = vmatprep.subr.mxu0 0.0
    %384 = vmatpush1.msra.mxu0 %v349
    %385 = vmatprep.subr.mxu0 0.0
    %386 = vmatpush1.msra.mxu0 %v350
    %387 = vmatprep.subr.mxu0 0.0
    %388 = vmatpush1.msra.mxu0 %v351
    %389 = vmatprep.subr.mxu0 0.0
    %390 = vmatpush1.msra.mxu0 %v352
    %391 = vmatprep.subr.mxu0 0.0
    %392 = vmatpush1.msra.mxu0 %v353
    %393 = vmatprep.subr.mxu0 0.0
    %394 = vmatpush1.msra.mxu0 0.0
    %395 = vmatprep.subr.mxu0 0.0
    %396 = vmatpush1.msra.mxu0 0.0
    %397 = vmatprep.subr.mxu0 0.0
    %398 = vmatpush1.msra.mxu0 0.0
    %399 = vmatprep.subr.mxu0 0.0
    %400 = vmatpush1.msra.mxu0 0.0
    %401 = vmatprep.subr.mxu0 0.0
    %402 = vmatpush1.msra.mxu0 0.0
    %403 = vmatprep.subr.mxu0 0.0
    %404 = vmatpush1.msra.mxu0 0.0
    %405 = vmatprep.subr.mxu0 0.0
    %406 = vmatpush1.msra.mxu0 0.0
    %407 = vmatprep.subr.mxu0 0.0
    %408 = vmatpush1.msra.mxu0 0.0
    %409 = vmatprep.subr.mxu0 0.0
    %410 = vmatpush1.msra.mxu0 0.0
    %411 = vmatprep.subr.mxu0 0.0
    %412 = vmatpush1.msra.mxu0 0.0
    %413 = vmatprep.subr.mxu0 0.0
    %414 = vmatpush1.msra.mxu0 0.0
    %415 = vmatprep.subr.mxu0 0.0
    %416 = vmatpush1.msra.mxu0 0.0
    %417 = vmatprep.subr.mxu0 0.0
    %418 = vmatpush1.msra.mxu0 0.0
    %419 = vmatprep.subr.mxu0 0.0
    %420 = vmatpush1.msra.mxu0 0.0
    %421 = vmatprep.subr.mxu0 0.0
    %422 = vmatpush1.msra.mxu0 0.0
    %423 = vmatprep.subr.mxu0 0.0
    %424 = vmatpush1.msra.mxu0 0.0
    %425 = vmatprep.mubr.f32.mxu0 0.0
    %426 = vmatmul.mubr.f32.gmra.mrb[0].mxu0 %v337
    %v427 = vpop.f32.mrb[0].mxu0
    %v428 = vadd.f32 %v359, %v427
    %v429 = vpop.f32.mrb[0].mxu0
    %430 = vdwg.mxu0
    %431 = vst [vmem:[#allocation8] sm:$0x3] %v428
    // Predicated region
    $region38: #{tpu_custom_call.1} parent=1 // pred_check
      _
    $region39: #{tpu_custom_call.1} parent=1 // pred_check_branch
      %433 = sbr.rel (0) target = $region41
    $region40: #{tpu_custom_call.1} parent=1 // pred_region
      %s435 = ssub.s32 32, 32
      %436 = vsyncadd [#allocation4], %s435
      %s438 = sshll.u32 [#allocation8], 4
      %s439 = int_to_ptr.vmem [resolvable:$true] %s438
      %441 = dma.vmem_to_hbm [thread:$0]  %s439, 32, %s6, [#allocation4]
    $region41: #{tpu_custom_call.1} parent=1 // pred_fallthru
      _
    // Predicated region
    $region42: #{tpu_custom_call.1} parent=1 // pred_check
      _
    $region43: #{tpu_custom_call.1} parent=1 // pred_check_branch
      %443 = sbr.rel (0) target = $region45
    $region44: #{tpu_custom_call.1} parent=1 // pred_region
      %444 = dma.done [#allocation4], 32
    $region45: #{tpu_custom_call.1} parent=1 // pred_fallthru
      _
    %445 = vsyncpa [#allocation3], 1
    %446 = vsyncpa [#allocation6], 1
    %447 = vsyncpa [#allocation4], 1

</llo_original>
